<compile_context>
chip_gen: v7x
topology: tpu7x:2x2x1
jax: 0.10.0
libtpu: 0.0.40
codegen_flags: <defaults>
</compile_context>

<pallas_src>
import jax
import jax.numpy as jnp
from jax.experimental import pallas as pl
from jax.experimental.pallas import tpu as pltpu


def _round_up(x, m):
    return (x + m - 1) // m * m


def _fusion_kernel(x_ref, w1_ref, b1_ref, w2_ref, b2_ref, seg_ref,
                   node_out_ref, graph_part_ref):
    """One node-tile of the fused sequence -> structure -> readout forward.

    x_ref          : [TILE_N, DINP]       padded input node features
    w1_ref, b1_ref : [DINP, H1P], [1, H1P]  sequence_model Linear (zero-padded)
    w2_ref, b2_ref : [H1P, H2P], [1, H2P]   structure_model Linear (zero-padded)
    seg_ref        : [BP, TILE_N]          one-hot node->graph (padded nodes = 0)
    node_out_ref   : [TILE_N, H1P+H2P]     cat([n1, n2], -1), lane-aligned split
    graph_out_ref  : [1, BP, H1P+H2P]      this tile's partial per-graph sums
    """
    x = x_ref[...]

    # sequence_model: Linear + ReLU -> node_feature1
    n1 = jnp.dot(x, w1_ref[...], preferred_element_type=jnp.float32)
    n1 = jnp.maximum(n1 + b1_ref[...], 0.0)

    # structure_model: Linear + ReLU on node_feature1 -> node_feature2
    n2 = jnp.dot(n1, w2_ref[...], preferred_element_type=jnp.float32)
    n2 = jnp.maximum(n2 + b2_ref[...], 0.0)

    # concat along lanes; H1P is a multiple of 128, so this stays lane-dense
    fused = jnp.concatenate([n1, n2], axis=-1)            # [TILE_N, H1P+H2P]
    node_out_ref[...] = fused.astype(node_out_ref.dtype)

    # fused per-graph sum readout: a single MXU pass, N as the contraction dim
    g = jnp.dot(seg_ref[...], fused, preferred_element_type=jnp.float32)
    graph_part_ref[0] = g.astype(graph_part_ref.dtype)


def fusion_network_forward(x, node2graph, num_graphs, params, *, tile_n=256):
    """Builds padded operands + readout matrix and calls the tiled kernel."""
    w1, b1, w2, b2 = params
    n, d_in = x.shape
    h1 = w1.shape[1]
    h2 = w2.shape[1]

    dinp = _round_up(d_in, 128)          # MXU-width contraction dims
    h1p = _round_up(h1, 128)             # lane-aligned concat boundary
    h2p = _round_up(h2, 128)
    hp = h1p + h2p
    np_ = _round_up(max(n, tile_n), tile_n)
    bp = _round_up(max(num_graphs, 8), 8)
    num_tiles = np_ // tile_n

    f32 = jnp.float32
    # zero-pad operands once (cheap XLA-side plumbing; padded lanes stay zero)
    x_p = jnp.zeros((np_, dinp), f32).at[:n, :d_in].set(x.astype(f32))
    w1_p = jnp.zeros((dinp, h1p), f32).at[:d_in, :h1].set(w1)
    b1_p = jnp.zeros((1, h1p), f32).at[:, :h1].set(b1)
    w2_p = jnp.zeros((h1p, h2p), f32).at[:h1, :h2].set(w2)
    b2_p = jnp.zeros((1, h2p), f32).at[:, :h2].set(b2)

    # one-hot readout matrix; padded node rows map to -1 -> all-zero columns,
    # so padded rows never contribute to any graph sum.
    # TODO(synk): for very large graphs replace with scalar-prefetched
    # node2graph + in-kernel segment accumulation to drop the dense seg matrix.
    n2g_p = jnp.full((np_,), -1, jnp.int32).at[:n].set(node2graph.astype(jnp.int32))
    seg = jax.nn.one_hot(n2g_p, bp, dtype=f32).T          # [BP, NP]

    flops = 2 * np_ * (dinp * h1p + h1p * h2p) + 2 * bp * np_ * hp
    bytes_accessed = 4 * (np_ * dinp + bp * np_ + np_ * hp + num_tiles * bp * hp
                          + dinp * h1p + h1p * h2p + h1p + h2p)

    node_out_p, graph_parts = pl.pallas_call(
        _fusion_kernel,
        out_shape=(
            jax.ShapeDtypeStruct((np_, hp), f32),
            jax.ShapeDtypeStruct((num_tiles, bp, hp), f32),
        ),
        grid=(num_tiles,),
        in_specs=[
            pl.BlockSpec((tile_n, dinp), lambda i: (i, 0)),   # x tile
            pl.BlockSpec((dinp, h1p), lambda i: (0, 0)),      # w1 (resident)
            pl.BlockSpec((1, h1p), lambda i: (0, 0)),         # b1 (resident)
            pl.BlockSpec((h1p, h2p), lambda i: (0, 0)),       # w2 (resident)
            pl.BlockSpec((1, h2p), lambda i: (0, 0)),         # b2 (resident)
            pl.BlockSpec((bp, tile_n), lambda i: (0, i)),     # seg tile
        ],
        out_specs=(
            pl.BlockSpec((tile_n, hp), lambda i: (i, 0)),     # node-feature tile
            pl.BlockSpec((1, bp, hp), lambda i: (i, 0, 0)),   # per-tile graph partial
        ),
        compiler_params=pltpu.CompilerParams(
            dimension_semantics=("parallel",),
            vmem_limit_bytes=32 * 1024 * 1024,
        ),
        cost_estimate=pl.CostEstimate(
            flops=flops, transcendentals=0, bytes_accessed=bytes_accessed),
    )(x_p, w1_p, b1_p, w2_p, b2_p, seg)

    # strip padding, reduce tile partials, finish the concat — free XLA plumbing
    node_feature = jnp.concatenate(
        [node_out_p[:n, :h1], node_out_p[:n, h1p:h1p + h2]], axis=-1)
    graph_sum = graph_parts.sum(axis=0)
    graph_feature = jnp.concatenate(
        [graph_sum[:num_graphs, :h1], graph_sum[:num_graphs, h1p:h1p + h2]], axis=-1)
    return {"graph_feature": graph_feature, "node_feature": node_feature}


def _reference_forward(x, node2graph, num_graphs, params):
    """Pure-JAX reference matching the PyTorch FusionNetwork semantics."""
    w1, b1, w2, b2 = params
    n1 = jax.nn.relu(x @ w1 + b1)                       # sequence_model node feature
    n2 = jax.nn.relu(n1 @ w2 + b2)                      # structure_model node feature
    seg = jax.nn.one_hot(node2graph, num_graphs, dtype=jnp.float32).T
    g1 = seg @ n1                                       # graph_feature1 (sum readout)
    g2 = seg @ n2                                       # graph_feature2 (sum readout)
    return {
        "graph_feature": jnp.concatenate([g1, g2], axis=-1),
        "node_feature": jnp.concatenate([n1, n2], axis=-1),
    }


if __name__ == "__main__":
    key = jax.random.PRNGKey(0)
    k_x, k_w1, k_b1, k_w2, k_b2 = jax.random.split(key, 5)

    # small synthetic "graph": 16 residues split across 2 graphs
    num_nodes = 16
    num_graphs = 2
    d_in = 32         # input residue feature dim
    h1 = 32           # sequence_model.output_dim
    h2 = 48           # structure_model.output_dim

    x = jax.random.normal(k_x, (num_nodes, d_in), dtype=jnp.float32)
    node2graph = jnp.concatenate(
        [jnp.zeros((num_nodes // 2,), jnp.int32),
         jnp.ones((num_nodes - num_nodes // 2,), jnp.int32)]
    )

    params = (
        jax.random.normal(k_w1, (d_in, h1), dtype=jnp.float32) * 0.1,
        jax.random.normal(k_b1, (1, h1), dtype=jnp.float32) * 0.1,
        jax.random.normal(k_w2, (h1, h2), dtype=jnp.float32) * 0.1,
        jax.random.normal(k_b2, (1, h2), dtype=jnp.float32) * 0.1,
    )

    out = fusion_network_forward(x, node2graph, num_graphs, params)
    jax.block_until_ready(out)

    ref = _reference_forward(x, node2graph, num_graphs, params)
    assert out["node_feature"].shape == (num_nodes, h1 + h2)
    assert out["graph_feature"].shape == (num_graphs, h1 + h2)
    assert jnp.allclose(out["node_feature"], ref["node_feature"],
                        atol=1e-4, rtol=1e-4)
    assert jnp.allclose(out["graph_feature"], ref["graph_feature"],
                        atol=1e-4, rtol=1e-4)

    print("KERNEL_OK")
</pallas_src>

<mosaic_0001>
module attributes {stable_mosaic.version = 11 : i64} {
  func.func @_fusion_kernel(%arg0: i32, %arg1: memref<256x128xf32, #tpu.memory_space<vmem>>, %arg2: memref<128x128xf32, #tpu.memory_space<vmem>>, %arg3: memref<1x128xf32, #tpu.memory_space<vmem>>, %arg4: memref<128x128xf32, #tpu.memory_space<vmem>>, %arg5: memref<1x128xf32, #tpu.memory_space<vmem>>, %arg6: memref<8x256xf32, #tpu.memory_space<vmem>>, %arg7: memref<256x256xf32, #tpu.memory_space<vmem>>, %arg8: memref<1x8x256xf32, #tpu.memory_space<vmem>>) attributes {dimension_semantics = [#tpu.dimension_semantics<parallel>], iteration_bounds = array<i64: 1>, scalar_prefetch = 0 : i64, scratch_operands = 0 : i64, tpu.core_type = #tpu.core_type<tc>, window_params = [{transform_indices = @transform_0, window_bounds = array<i64: 256, 128>}, {pipeline_mode = #tpu.pipeline_mode<synchronous>, transform_indices = @transform_1, window_bounds = array<i64: 128, 128>}, {pipeline_mode = #tpu.pipeline_mode<synchronous>, transform_indices = @transform_2, window_bounds = array<i64: 1, 128>}, {pipeline_mode = #tpu.pipeline_mode<synchronous>, transform_indices = @transform_3, window_bounds = array<i64: 128, 128>}, {pipeline_mode = #tpu.pipeline_mode<synchronous>, transform_indices = @transform_4, window_bounds = array<i64: 1, 128>}, {transform_indices = @transform_5, window_bounds = array<i64: 8, 256>}, {transform_indices = @transform_6, window_bounds = array<i64: 256, 256>}, {transform_indices = @transform_7, window_bounds = array<i64: 1, 8, 256>}]} {
    %c0 = arith.constant 0 : index
    %c0_0 = arith.constant 0 : index
    %0 = vector.load %arg1[%c0, %c0_0] : memref<256x128xf32, #tpu.memory_space<vmem>>, vector<256x128xf32>
    %c0_1 = arith.constant 0 : index
    %c0_2 = arith.constant 0 : index
    %1 = vector.load %arg2[%c0_1, %c0_2] : memref<128x128xf32, #tpu.memory_space<vmem>>, vector<128x128xf32>
    %cst = arith.constant dense<0.000000e+00> : vector<256x128xf32>
    %2 = tpu.matmul %0, %1, %cst {dimension_numbers = #tpu.dot_dimension_numbers<[1], [0], [0], [1], [0, 0, 1, 1], [], []>} : vector<256x128xf32>, vector<128x128xf32>, vector<256x128xf32> -> vector<256x128xf32>
    %c0_3 = arith.constant 0 : index
    %c0_4 = arith.constant 0 : index
    %3 = vector.load %arg3[%c0_3, %c0_4] : memref<1x128xf32, #tpu.memory_space<vmem>>, vector<1x128xf32>
    %4 = vector.broadcast %3 : vector<1x128xf32> to vector<256x128xf32>
    %5 = arith.addf %2, %4 : vector<256x128xf32>
    %cst_5 = arith.constant 0.000000e+00 : f32
    %6 = vector.broadcast %cst_5 : f32 to vector<256x128xf32>
    %7 = arith.maximumf %5, %6 : vector<256x128xf32>
    %c0_6 = arith.constant 0 : index
    %c0_7 = arith.constant 0 : index
    %8 = vector.load %arg4[%c0_6, %c0_7] : memref<128x128xf32, #tpu.memory_space<vmem>>, vector<128x128xf32>
    %cst_8 = arith.constant dense<0.000000e+00> : vector<256x128xf32>
    %9 = tpu.matmul %7, %8, %cst_8 {dimension_numbers = #tpu.dot_dimension_numbers<[1], [0], [0], [1], [0, 0, 1, 1], [], []>} : vector<256x128xf32>, vector<128x128xf32>, vector<256x128xf32> -> vector<256x128xf32>
    %c0_9 = arith.constant 0 : index
    %c0_10 = arith.constant 0 : index
    %10 = vector.load %arg5[%c0_9, %c0_10] : memref<1x128xf32, #tpu.memory_space<vmem>>, vector<1x128xf32>
    %11 = vector.broadcast %10 : vector<1x128xf32> to vector<256x128xf32>
    %12 = arith.addf %9, %11 : vector<256x128xf32>
    %cst_11 = arith.constant 0.000000e+00 : f32
    %13 = vector.broadcast %cst_11 : f32 to vector<256x128xf32>
    %14 = arith.maximumf %12, %13 : vector<256x128xf32>
    %15 = tpu.concatenate %7, %14 in 1 : vector<256x128xf32>, vector<256x128xf32> -> vector<256x256xf32>
    %c0_12 = arith.constant 0 : index
    %c0_13 = arith.constant 0 : index
    %16 = vector.load %arg7[%c0_12, %c0_13] : memref<256x256xf32, #tpu.memory_space<vmem>>, vector<256x256xf32>
    tpu.vector_store %arg7[%c0_12, %c0_13], %15 {strides = array<i32>} : memref<256x256xf32, #tpu.memory_space<vmem>>, vector<256x256xf32>,
    %c0_14 = arith.constant 0 : index
    %c0_15 = arith.constant 0 : index
    %17 = vector.load %arg6[%c0_14, %c0_15] : memref<8x256xf32, #tpu.memory_space<vmem>>, vector<8x256xf32>
    %cst_16 = arith.constant dense<0.000000e+00> : vector<8x256xf32>
    %18 = tpu.matmul %17, %15, %cst_16 {dimension_numbers = #tpu.dot_dimension_numbers<[1], [0], [0], [1], [0, 0, 1, 1], [], []>} : vector<8x256xf32>, vector<256x256xf32>, vector<8x256xf32> -> vector<8x256xf32>
    %c0_17 = arith.constant 0 : index
    %c0_18 = arith.constant 0 : index
    %c0_19 = arith.constant 0 : index
    %19 = vector.load %arg8[%c0_17, %c0_18, %c0_19] : memref<1x8x256xf32, #tpu.memory_space<vmem>>, vector<1x8x256xf32>
    %20 = vector.shape_cast %19 : vector<1x8x256xf32> to vector<8x256xf32>
    %21 = vector.shape_cast %18 : vector<8x256xf32> to vector<1x8x256xf32>
    tpu.vector_store %arg8[%c0_17, %c0_18, %c0_19], %21 {strides = array<i32>} : memref<1x8x256xf32, #tpu.memory_space<vmem>>, vector<1x8x256xf32>,
    return
  }
  func.func @transform_0(%arg0: i32) -> (i32, i32) {
    %c0_i32 = arith.constant 0 : i32
    %c0_i32_0 = arith.constant 0 : i32
    return %arg0, %c0_i32 : i32, i32
  }
  func.func @transform_1(%arg0: i32) -> (i32, i32) {
    %c0_i32 = arith.constant 0 : i32
    %c0_i32_0 = arith.constant 0 : i32
    %c0_i32_1 = arith.constant 0 : i32
    return %c0_i32, %c0_i32_0 : i32, i32
  }
  func.func @transform_2(%arg0: i32) -> (i32, i32) {
    %c0_i32 = arith.constant 0 : i32
    %c0_i32_0 = arith.constant 0 : i32
    %c0_i32_1 = arith.constant 0 : i32
    return %c0_i32, %c0_i32_0 : i32, i32
  }
  func.func @transform_3(%arg0: i32) -> (i32, i32) {
    %c0_i32 = arith.constant 0 : i32
    %c0_i32_0 = arith.constant 0 : i32
    %c0_i32_1 = arith.constant 0 : i32
    return %c0_i32, %c0_i32_0 : i32, i32
  }
  func.func @transform_4(%arg0: i32) -> (i32, i32) {
    %c0_i32 = arith.constant 0 : i32
    %c0_i32_0 = arith.constant 0 : i32
    %c0_i32_1 = arith.constant 0 : i32
    return %c0_i32, %c0_i32_0 : i32, i32
  }
  func.func @transform_5(%arg0: i32) -> (i32, i32) {
    %c0_i32 = arith.constant 0 : i32
    %c0_i32_0 = arith.constant 0 : i32
    return %c0_i32, %arg0 : i32, i32
  }
  func.func @transform_6(%arg0: i32) -> (i32, i32) {
    %c0_i32 = arith.constant 0 : i32
    %c0_i32_0 = arith.constant 0 : i32
    return %arg0, %c0_i32 : i32, i32
  }
  func.func @transform_7(%arg0: i32) -> (i32, i32, i32) {
    %c0_i32 = arith.constant 0 : i32
    %c0_i32_0 = arith.constant 0 : i32
    %c0_i32_1 = arith.constant 0 : i32
    return %arg0, %c0_i32, %c0_i32_0 : i32, i32, i32
  }
}

</mosaic_0001>

<llo_original>
// kernel: tpu_custom_call.1
$region0: #{tpu_custom_call.1}
  #allocation0 [shape = 'u32[]', space=smem, size = 0x4, offset = 0x4, fixed_abs, tag = 'smem constant byte address 0x4 - core index']
  #allocation1 [shape = 'u32[144,128]{1,0:T(1,128)}', space=vmem, size = 0x12000, scoped, tag = 'internal scratch']
  %s0 = inlined_call_operand.hbm [shape: f32[256,128], index: 0, kind: input, shape index: {}]
  %s1 = inlined_call_operand.hbm [shape: f32[128,128], index: 1, kind: input, shape index: {}]
  %s2 = inlined_call_operand.vmem [shape: f32[1,128], index: 2, kind: input, shape index: {}]
  %s3 = inlined_call_operand.hbm [shape: f32[128,128], index: 3, kind: input, shape index: {}]
  %s4 = inlined_call_operand.vmem [shape: f32[1,128], index: 4, kind: input, shape index: {}]
  %s5 = inlined_call_operand.vmem [shape: f32[8,256], index: 5, kind: input, shape index: {}]
  %s6 = inlined_call_operand.hbm [shape: f32[256,256], index: 6, kind: output, shape index: {0}]
  %s7 = inlined_call_operand.hbm [shape: f32[1,8,256], index: 7, kind: output, shape index: {1}]
  %8 = xla_tuple %s6, %s7
  %s9 = sld [smem:[#allocation0]]
  $region54: #{tpu_custom_call.1} parent=0
    _
  %s11 = ssub.s32 1, %s9
  %s12 = scalar_select 0, %s11, %s9
  $region1: #{tpu_custom_call.1} parent=0
    #allocation2 [shape = 'u8[131072]{0}', space=vmem, size = 0x20000, scoped, tag = 'input window, operand 0, single buffered']
    #allocation3 [shape = 's32[1]{0}', space=sflag, size = 0x4, scoped, tag = 'scoped memory for tpu_custom_call.1']
    #allocation4 [shape = 's32[1]{0}', space=sflag, size = 0x4, scoped, tag = 'scoped memory for tpu_custom_call.1']
    #allocation5 [shape = 'u8[65536]{0}', space=vmem, size = 0x10000, scoped, tag = 'input window, operand 1, single buffered']
    #allocation6 [shape = 's32[1]{0}', space=sflag, size = 0x4, scoped, tag = 'scoped memory for tpu_custom_call.1']
    #allocation7 [shape = 'u8[65536]{0}', space=vmem, size = 0x10000, scoped, tag = 'input window, operand 3, single buffered']
    #allocation8 [shape = 'u8[262144]{0}', space=vmem, size = 0x40000, scoped, tag = 'output window, operand 0, single buffered']
    #allocation9 [shape = 'u8[8192]{0}', space=vmem, size = 0x2000, scoped, tag = 'output window, operand 1, single buffered']
    #allocation10 [shape = 's32[1]{0}', space=sflag, size = 0x4, scoped, tag = 'scoped memory for tpu_custom_call.1']
    %13 = vsyncpa [#allocation3], 0
    %14 = vsyncpa [#allocation6], 0
    %15 = vsyncpa [#allocation4], 0
    %16 = vsyncpa [#allocation10], 0
    // Predicated region
    $region2: #{tpu_custom_call.1} parent=1 // pred_check
      _
    $region3: #{tpu_custom_call.1} parent=1 // pred_check_branch
      %18 = sbr.rel (0) target = $region5
    $region4: #{tpu_custom_call.1} parent=1 // pred_region
      %s20 = ssub.s32 4096, 4096
      %21 = vsyncadd [#allocation3], %s20
      %s22 = sshll.u32 [#allocation2], 4
      %s23 = int_to_ptr.vmem [resolvable:$true] %s22
      %28 = dma.hbm_to_vmem [thread:$0]  %s0, 4096, %s23, [#allocation3], 128, 128, 8
    $region5: #{tpu_custom_call.1} parent=1 // pred_fallthru
      _
    // Predicated region
    $region6: #{tpu_custom_call.1} parent=1 // pred_check
      _
    $region7: #{tpu_custom_call.1} parent=1 // pred_check_branch
      %30 = sbr.rel (0) target = $region9
    $region8: #{tpu_custom_call.1} parent=1 // pred_region
      %s32 = ssub.s32 2048, 2048
      %33 = vsyncadd [#allocation6], %s32
      %s34 = sshll.u32 [#allocation5], 4
      %s35 = int_to_ptr.vmem [resolvable:$true] %s34
      %40 = dma.hbm_to_vmem [thread:$0]  %s1, 2048, %s35, [#allocation6], 128, 128, 8
    $region9: #{tpu_custom_call.1} parent=1 // pred_fallthru
      _
    // Predicated region
    $region10: #{tpu_custom_call.1} parent=1 // pred_check
      _
    $region11: #{tpu_custom_call.1} parent=1 // pred_check_branch
      %42 = sbr.rel (0) target = $region13
    $region12: #{tpu_custom_call.1} parent=1 // pred_region
      _
    $region13: #{tpu_custom_call.1} parent=1 // pred_fallthru
      _
    // Predicated region
    $region14: #{tpu_custom_call.1} parent=1 // pred_check
      _
    $region15: #{tpu_custom_call.1} parent=1 // pred_check_branch
      %44 = sbr.rel (0) target = $region17
    $region16: #{tpu_custom_call.1} parent=1 // pred_region
      %s46 = ssub.s32 2048, 2048
      %47 = vsyncadd [#allocation6], %s46
      %s48 = sshll.u32 [#allocation7], 4
      %s49 = int_to_ptr.vmem [resolvable:$true] %s48
      %54 = dma.hbm_to_vmem [thread:$0]  %s3, 2048, %s49, [#allocation6], 128, 128, 8
    $region17: #{tpu_custom_call.1} parent=1 // pred_fallthru
      _
    // Predicated region
    $region18: #{tpu_custom_call.1} parent=1 // pred_check
      _
    $region19: #{tpu_custom_call.1} parent=1 // pred_check_branch
      %56 = sbr.rel (0) target = $region21
    $region20: #{tpu_custom_call.1} parent=1 // pred_region
      _
    $region21: #{tpu_custom_call.1} parent=1 // pred_fallthru
      _
    // Predicated region
    $region22: #{tpu_custom_call.1} parent=1 // pred_check
      _
    $region23: #{tpu_custom_call.1} parent=1 // pred_check_branch
      %58 = sbr.rel (0) target = $region25
    $region24: #{tpu_custom_call.1} parent=1 // pred_region
      _
    $region25: #{tpu_custom_call.1} parent=1 // pred_fallthru
      _
    // Predicated region
    $region26: #{tpu_custom_call.1} parent=1 // pred_check
      _
    $region27: #{tpu_custom_call.1} parent=1 // pred_check_branch
      %60 = sbr.rel (0) target = $region29
    $region28: #{tpu_custom_call.1} parent=1 // pred_region
      %61 = dma.done [#allocation3], 4096
    $region29: #{tpu_custom_call.1} parent=1 // pred_fallthru
      _
    // Predicated region
    $region30: #{tpu_custom_call.1} parent=1 // pred_check
      _
    $region31: #{tpu_custom_call.1} parent=1 // pred_check_branch
      %63 = sbr.rel (0) target = $region33
    $region32: #{tpu_custom_call.1} parent=1 // pred_region
      %64 = dma.done [#allocation6], 2048
    $region33: #{tpu_custom_call.1} parent=1 // pred_fallthru
      _
    // Predicated region
    $region34: #{tpu_custom_call.1} parent=1 // pred_check
      _
    $region35: #{tpu_custom_call.1} parent=1 // pred_check_branch
      %66 = sbr.rel (0) target = $region37
    $region36: #{tpu_custom_call.1} parent=1 // pred_region
      %67 = dma.done [#allocation6], 2048
    $region37: #{tpu_custom_call.1} parent=1 // pred_fallthru
      _
    %v68 = vld [vmem:[#allocation2] sm:$0xff]
    %v69 = vld [vmem:[#allocation2 + $0x8] sm:$0xff]
    %v70 = vld [vmem:[#allocation2 + $0x10] sm:$0xff]
    %v71 = vld [vmem:[#allocation2 + $0x18] sm:$0xff]
    %v72 = vld [vmem:[#allocation2 + $0x20] sm:$0xff]
    %v73 = vld [vmem:[#allocation2 + $0x28] sm:$0xff]
    %v74 = vld [vmem:[#allocation2 + $0x30] sm:$0xff]
    %v75 = vld [vmem:[#allocation2 + $0x38] sm:$0xff]
    %v76 = vld [vmem:[#allocation2 + $0x40] sm:$0xff]
    %v77 = vld [vmem:[#allocation2 + $0x48] sm:$0xff]
    %v78 = vld [vmem:[#allocation2 + $0x50] sm:$0xff]
    %v79 = vld [vmem:[#allocation2 + $0x58] sm:$0xff]
    %v80 = vld [vmem:[#allocation2 + $0x60] sm:$0xff]
    %v81 = vld [vmem:[#allocation2 + $0x68] sm:$0xff]
    %v82 = vld [vmem:[#allocation2 + $0x70] sm:$0xff]
    %v83 = vld [vmem:[#allocation2 + $0x78] sm:$0xff]
    %v84 = vld [vmem:[#allocation2 + $0x80] sm:$0xff]
    %v85 = vld [vmem:[#allocation2 + $0x88] sm:$0xff]
    %v86 = vld [vmem:[#allocation2 + $0x90] sm:$0xff]
    %v87 = vld [vmem:[#allocation2 + $0x98] sm:$0xff]
    %v88 = vld [vmem:[#allocation2 + $0xa0] sm:$0xff]
    %v89 = vld [vmem:[#allocation2 + $0xa8] sm:$0xff]
    %v90 = vld [vmem:[#allocation2 + $0xb0] sm:$0xff]
    %v91 = vld [vmem:[#allocation2 + $0xb8] sm:$0xff]
    %v92 = vld [vmem:[#allocation2 + $0xc0] sm:$0xff]
    %v93 = vld [vmem:[#allocation2 + $0xc8] sm:$0xff]
    %v94 = vld [vmem:[#allocation2 + $0xd0] sm:$0xff]
    %v95 = vld [vmem:[#allocation2 + $0xd8] sm:$0xff]
    %v96 = vld [vmem:[#allocation2 + $0xe0] sm:$0xff]
    %v97 = vld [vmem:[#allocation2 + $0xe8] sm:$0xff]
    %v98 = vld [vmem:[#allocation2 + $0xf0] sm:$0xff]
    %v99 = vld [vmem:[#allocation2 + $0xf8] sm:$0xff]
    %v100 = vld [vmem:[#allocation5] sm:$0xff]
    %v101 = vld [vmem:[#allocation5 + $0x8] sm:$0xff]
    %v102 = vld [vmem:[#allocation5 + $0x10] sm:$0xff]
    %v103 = vld [vmem:[#allocation5 + $0x18] sm:$0xff]
    %v104 = vld [vmem:[#allocation5 + $0x20] sm:$0xff]
    %v105 = vld [vmem:[#allocation5 + $0x28] sm:$0xff]
    %v106 = vld [vmem:[#allocation5 + $0x30] sm:$0xff]
    %v107 = vld [vmem:[#allocation5 + $0x38] sm:$0xff]
    %v108 = vld [vmem:[#allocation5 + $0x40] sm:$0xff]
    %v109 = vld [vmem:[#allocation5 + $0x48] sm:$0xff]
    %v110 = vld [vmem:[#allocation5 + $0x50] sm:$0xff]
    %v111 = vld [vmem:[#allocation5 + $0x58] sm:$0xff]
    %v112 = vld [vmem:[#allocation5 + $0x60] sm:$0xff]
    %v113 = vld [vmem:[#allocation5 + $0x68] sm:$0xff]
    %v114 = vld [vmem:[#allocation5 + $0x70] sm:$0xff]
    %v115 = vld [vmem:[#allocation5 + $0x78] sm:$0xff]
    %v116 = vld [vmem:[%s2] sm:$0x1]
    %v118 = vlaneseq
    %v119 = vshrl.u32 %v118, 7
    %v120 = vsub.s32 0, %v119
    %v121 = vrot.slane %v116, %v120
    %123 = vmatprep.subr.mxu0 0.0
    %124 = vmatpush1.msra.mxu0 %v100
    %125 = vmatprep.subr.mxu0 0.0
    %126 = vmatpush1.msra.mxu0 %v101
    %127 = vmatprep.subr.mxu0 0.0
    %128 = vmatpush1.msra.mxu0 %v102
    %129 = vmatprep.subr.mxu0 0.0
    %130 = vmatpush1.msra.mxu0 %v103
    %131 = vmatprep.subr.mxu0 0.0
    %132 = vmatpush1.msra.mxu0 %v104
    %133 = vmatprep.subr.mxu0 0.0
    %134 = vmatpush1.msra.mxu0 %v105
    %135 = vmatprep.subr.mxu0 0.0
    %136 = vmatpush1.msra.mxu0 %v106
    %137 = vmatprep.subr.mxu0 0.0
    %138 = vmatpush1.msra.mxu0 %v107
    %139 = vmatprep.subr.mxu0 0.0
    %140 = vmatpush1.msra.mxu0 %v108
    %141 = vmatprep.subr.mxu0 0.0
    %142 = vmatpush1.msra.mxu0 %v109
    %143 = vmatprep.subr.mxu0 0.0
    %144 = vmatpush1.msra.mxu0 %v110
    %145 = vmatprep.subr.mxu0 0.0
    %146 = vmatpush1.msra.mxu0 %v111
    %147 = vmatprep.subr.mxu0 0.0
    %148 = vmatpush1.msra.mxu0 %v112
    %149 = vmatprep.subr.mxu0 0.0
    %150 = vmatpush1.msra.mxu0 %v113
    %151 = vmatprep.subr.mxu0 0.0
    %152 = vmatpush1.msra.mxu0 %v114
    %153 = vmatprep.subr.mxu0 0.0
    %154 = vmatpush1.msra.mxu0 %v115
    %155 = vmatprep.subr.mxu0 0.0
    %156 = vmatpush1.msra.mxu0 0.0
    %157 = vmatprep.subr.mxu0 0.0
    %158 = vmatpush1.msra.mxu0 0.0
    %159 = vmatprep.subr.mxu0 0.0
    %160 = vmatpush1.msra.mxu0 0.0
    %161 = vmatprep.subr.mxu0 0.0
    %162 = vmatpush1.msra.mxu0 0.0
    %163 = vmatprep.subr.mxu0 0.0
    %164 = vmatpush1.msra.mxu0 0.0
    %165 = vmatprep.subr.mxu0 0.0
    %166 = vmatpush1.msra.mxu0 0.0
    %167 = vmatprep.subr.mxu0 0.0
    %168 = vmatpush1.msra.mxu0 0.0
    %169 = vmatprep.subr.mxu0 0.0
    %170 = vmatpush1.msra.mxu0 0.0
    %171 = vmatprep.subr.mxu0 0.0
    %172 = vmatpush1.msra.mxu0 0.0
    %173 = vmatprep.subr.mxu0 0.0
    %174 = vmatpush1.msra.mxu0 0.0
    %175 = vmatprep.subr.mxu0 0.0
    %176 = vmatpush1.msra.mxu0 0.0
    %177 = vmatprep.subr.mxu0 0.0
    %178 = vmatpush1.msra.mxu0 0.0
    %179 = vmatprep.subr.mxu0 0.0
    %180 = vmatpush1.msra.mxu0 0.0
    %181 = vmatprep.subr.mxu0 0.0
    %182 = vmatpush1.msra.mxu0 0.0
    %183 = vmatprep.subr.mxu0 0.0
    %184 = vmatpush1.msra.mxu0 0.0
    %185 = vmatprep.subr.mxu0 0.0
    %186 = vmatpush1.msra.mxu0 0.0
    %187 = vmatprep.mubr.f32.mxu0 0.0
    %188 = vmatmul.mubr.f32.gmra.mrb[0].mxu0 %v68
    %v189 = vpop.f32.mrb[0].mxu0
    %v190 = vadd.f32 %v121, %v189
    %v191 = vpop.f32.mrb[0].mxu0
    %192 = vmatprep.mubr.f32.mxu0 0.0
    %193 = vmatmul.mubr.f32.gmra.mrb[0].mxu0 %v69
    %v194 = vpop.f32.mrb[0].mxu0
    %v195 = vadd.f32 %v121, %v194
    %v196 = vpop.f32.mrb[0].mxu0
    %197 = vmatprep.mubr.f32.mxu0 0.0
    %198 = vmatmul.mubr.f32.gmra.mrb[0].mxu0 %v70
    %v199 = vpop.f32.mrb[0].mxu0
    %v200 = vadd.f32 %v121, %v199
    %v201 = vpop.f32.mrb[0].mxu0
    %202 = vmatprep.mubr.f32.mxu0 0.0
    %203 = vmatmul.mubr.f32.gmra.mrb[0].mxu0 %v71
    %v204 = vpop.f32.mrb[0].mxu0
    %v205 = vadd.f32 %v121, %v204
    %v206 = vpop.f32.mrb[0].mxu0
    %207 = vmatprep.mubr.f32.mxu0 0.0
    %208 = vmatmul.mubr.f32.gmra.mrb[0].mxu0 %v72
    %v209 = vpop.f32.mrb[0].mxu0
    %v210 = vadd.f32 %v121, %v209
    %v211 = vpop.f32.mrb[0].mxu0
    %212 = vmatprep.mubr.f32.mxu0 0.0
    %213 = vmatmul.mubr.f32.gmra.mrb[0].mxu0 %v73
    %v214 = vpop.f32.mrb[0].mxu0
    %v215 = vadd.f32 %v121, %v214
    %v216 = vpop.f32.mrb[0].mxu0
    %217 = vmatprep.mubr.f32.mxu0 0.0
    %218 = vmatmul.mubr.f32.gmra.mrb[0].mxu0 %v74
    %v219 = vpop.f32.mrb[0].mxu0
    %v220 = vadd.f32 %v121, %v219
    %v221 = vpop.f32.mrb[0].mxu0
    %222 = vmatprep.mubr.f32.mxu0 0.0
    %223 = vmatmul.mubr.f32.gmra.mrb[0].mxu0 %v75
    %v224 = vpop.f32.mrb[0].mxu0
    %v225 = vadd.f32 %v121, %v224
    %v226 = vpop.f32.mrb[0].mxu0
    %227 = vmatprep.mubr.f32.mxu0 0.0
    %228 = vmatmul.mubr.f32.gmra.mrb[0].mxu0 %v76
    %v229 = vpop.f32.mrb[0].mxu0
    %v230 = vadd.f32 %v121, %v229
    %v231 = vpop.f32.mrb[0].mxu0
    %232 = vmatprep.mubr.f32.mxu0 0.0
    %233 = vmatmul.mubr.f32.gmra.mrb[0].mxu0 %v77
    %v234 = vpop.f32.mrb[0].mxu0
    %v235 = vadd.f32 %v121, %v234
    %v236 = vpop.f32.mrb[0].mxu0
    %237 = vmatprep.mubr.f32.mxu0 0.0
    %238 = vmatmul.mubr.f32.gmra.mrb[0].mxu0 %v78
    %v239 = vpop.f32.mrb[0].mxu0
    %v240 = vadd.f32 %v121, %v239
    %v241 = vpop.f32.mrb[0].mxu0
    %242 = vmatprep.mubr.f32.mxu0 0.0
    %243 = vmatmul.mubr.f32.gmra.mrb[0].mxu0 %v79
    %v244 = vpop.f32.mrb[0].mxu0
    %v245 = vadd.f32 %v121, %v244
    %v246 = vpop.f32.mrb[0].mxu0
    %247 = vmatprep.mubr.f32.mxu0 0.0
    %248 = vmatmul.mubr.f32.gmra.mrb[0].mxu0 %v80
    %v249 = vpop.f32.mrb[0].mxu0
    %v250 = vadd.f32 %v121, %v249
    %v251 = vpop.f32.mrb[0].mxu0
    %252 = vmatprep.mubr.f32.mxu0 0.0
    %253 = vmatmul.mubr.f32.gmra.mrb[0].mxu0 %v81
    %v254 = vpop.f32.mrb[0].mxu0
    %v255 = vadd.f32 %v121, %v254
    %v256 = vpop.f32.mrb[0].mxu0
    %257 = vmatprep.mubr.f32.mxu0 0.0
    %258 = vmatmul.mubr.f32.gmra.mrb[0].mxu0 %v82
    %v259 = vpop.f32.mrb[0].mxu0
    %v260 = vadd.f32 %v121, %v259
    %v261 = vpop.f32.mrb[0].mxu0
    %262 = vmatprep.mubr.f32.mxu0 0.0
    %263 = vmatmul.mubr.f32.gmra.mrb[0].mxu0 %v83
    %v264 = vpop.f32.mrb[0].mxu0
    %v265 = vadd.f32 %v121, %v264
    %v266 = vpop.f32.mrb[0].mxu0
    %267 = vmatprep.mubr.f32.mxu0 0.0
    %268 = vmatmul.mubr.f32.gmra.mrb[0].mxu0 %v84
    %v269 = vpop.f32.mrb[0].mxu0
    %v270 = vadd.f32 %v121, %v269
    %v271 = vpop.f32.mrb[0].mxu0
    %272 = vmatprep.mubr.f32.mxu0 0.0
    %273 = vmatmul.mubr.f32.gmra.mrb[0].mxu0 %v85
    %v274 = vpop.f32.mrb[0].mxu0
    %v275 = vadd.f32 %v121, %v274
    %v276 = vpop.f32.mrb[0].mxu0
    %277 = vmatprep.mubr.f32.mxu0 0.0
    %278 = vmatmul.mubr.f32.gmra.mrb[0].mxu0 %v86
    %v279 = vpop.f32.mrb[0].mxu0
    %v280 = vadd.f32 %v121, %v279
    %v281 = vpop.f32.mrb[0].mxu0
    %282 = vmatprep.mubr.f32.mxu0 0.0
    %283 = vmatmul.mubr.f32.gmra.mrb[0].mxu0 %v87
    %v284 = vpop.f32.mrb[0].mxu0
    %v285 = vadd.f32 %v121, %v284
    %v286 = vpop.f32.mrb[0].mxu0
    %287 = vmatprep.mubr.f32.mxu0 0.0
    %288 = vmatmul.mubr.f32.gmra.mrb[0].mxu0 %v88
    %v289 = vpop.f32.mrb[0].mxu0
    %v290 = vadd.f32 %v121, %v289
    %v291 = vpop.f32.mrb[0].mxu0
    %292 = vmatprep.mubr.f32.mxu0 0.0
    %293 = vmatmul.mubr.f32.gmra.mrb[0].mxu0 %v89
    %v294 = vpop.f32.mrb[0].mxu0
    %v295 = vadd.f32 %v121, %v294
    %v296 = vpop.f32.mrb[0].mxu0
    %297 = vmatprep.mubr.f32.mxu0 0.0
    %298 = vmatmul.mubr.f32.gmra.mrb[0].mxu0 %v90
    %v299 = vpop.f32.mrb[0].mxu0
    %v300 = vadd.f32 %v121, %v299
    %v301 = vpop.f32.mrb[0].mxu0
    %302 = vmatprep.mubr.f32.mxu0 0.0
    %303 = vmatmul.mubr.f32.gmra.mrb[0].mxu0 %v91
    %v304 = vpop.f32.mrb[0].mxu0
    %v305 = vadd.f32 %v121, %v304
    %v306 = vpop.f32.mrb[0].mxu0
    %307 = vmatprep.mubr.f32.mxu0 0.0
    %308 = vmatmul.mubr.f32.gmra.mrb[0].mxu0 %v92
    %v309 = vpop.f32.mrb[0].mxu0
    %v310 = vadd.f32 %v121, %v309
    %v311 = vpop.f32.mrb[0].mxu0
    %312 = vmatprep.mubr.f32.mxu0 0.0
    %313 = vmatmul.mubr.f32.gmra.mrb[0].mxu0 %v93
    %v314 = vpop.f32.mrb[0].mxu0
    %v315 = vadd.f32 %v121, %v314
    %v316 = vpop.f32.mrb[0].mxu0
    %317 = vmatprep.mubr.f32.mxu0 0.0
    %318 = vmatmul.mubr.f32.gmra.mrb[0].mxu0 %v94
    %v319 = vpop.f32.mrb[0].mxu0
    %v320 = vadd.f32 %v121, %v319
    %v321 = vpop.f32.mrb[0].mxu0
    %322 = vmatprep.mubr.f32.mxu0 0.0
    %323 = vmatmul.mubr.f32.gmra.mrb[0].mxu0 %v95
    %v324 = vpop.f32.mrb[0].mxu0
    %v325 = vadd.f32 %v121, %v324
    %v326 = vpop.f32.mrb[0].mxu0
    %327 = vmatprep.mubr.f32.mxu0 0.0
    %328 = vmatmul.mubr.f32.gmra.mrb[0].mxu0 %v96
    %v329 = vpop.f32.mrb[0].mxu0
    %v330 = vadd.f32 %v121, %v329
    %v331 = vpop.f32.mrb[0].mxu0
    %332 = vmatprep.mubr.f32.mxu0 0.0
    %333 = vmatmul.mubr.f32.gmra.mrb[0].mxu0 %v97
    %v334 = vpop.f32.mrb[0].mxu0
    %v335 = vadd.f32 %v121, %v334
    %v336 = vpop.f32.mrb[0].mxu0
    %337 = vmatprep.mubr.f32.mxu0 0.0
    %338 = vmatmul.mubr.f32.gmra.mrb[0].mxu0 %v98
    %v339 = vpop.f32.mrb[0].mxu0
    %v340 = vadd.f32 %v121, %v339
    %v341 = vpop.f32.mrb[0].mxu0
    %342 = vmatprep.mubr.f32.mxu0 0.0
    %343 = vmatmul.mubr.f32.gmra.mrb[0].mxu0 %v99
    %v344 = vpop.f32.mrb[0].mxu0
    %v345 = vadd.f32 %v121, %v344
    %v346 = vpop.f32.mrb[0].mxu0
    %347 = vdwg.mxu0
    %v348 = vmax.f32 %v190, 0.0
    %v349 = vmax.f32 %v195, 0.0
    %v350 = vmax.f32 %v200, 0.0
    %v351 = vmax.f32 %v205, 0.0
    %v352 = vmax.f32 %v210, 0.0
    %v353 = vmax.f32 %v215, 0.0
    %v354 = vmax.f32 %v220, 0.0
    %v355 = vmax.f32 %v225, 0.0
    %v356 = vmax.f32 %v230, 0.0
    %v357 = vmax.f32 %v235, 0.0
    %v358 = vmax.f32 %v240, 0.0
    %v359 = vmax.f32 %v245, 0.0
    %v360 = vmax.f32 %v250, 0.0
    %v361 = vmax.f32 %v255, 0.0
    %v362 = vmax.f32 %v260, 0.0
    %v363 = vmax.f32 %v265, 0.0
    %v364 = vmax.f32 %v270, 0.0
    %v365 = vmax.f32 %v275, 0.0
    %v366 = vmax.f32 %v280, 0.0
    %v367 = vmax.f32 %v285, 0.0
    %v368 = vmax.f32 %v290, 0.0
    %v369 = vmax.f32 %v295, 0.0
    %v370 = vmax.f32 %v300, 0.0
    %v371 = vmax.f32 %v305, 0.0
    %v372 = vmax.f32 %v310, 0.0
    %v373 = vmax.f32 %v315, 0.0
    %v374 = vmax.f32 %v320, 0.0
    %v375 = vmax.f32 %v325, 0.0
    %v376 = vmax.f32 %v330, 0.0
    %v377 = vmax.f32 %v335, 0.0
    %v378 = vmax.f32 %v340, 0.0
    %v379 = vmax.f32 %v345, 0.0
    %v380 = vld [vmem:[#allocation7] sm:$0xff]
    %v381 = vld [vmem:[#allocation7 + $0x8] sm:$0xff]
    %v382 = vld [vmem:[#allocation7 + $0x10] sm:$0xff]
    %v383 = vld [vmem:[#allocation7 + $0x18] sm:$0xff]
    %v384 = vld [vmem:[#allocation7 + $0x20] sm:$0xff]
    %v385 = vld [vmem:[#allocation7 + $0x28] sm:$0xff]
    %v386 = vld [vmem:[#allocation7 + $0x30] sm:$0xff]
    %v387 = vld [vmem:[#allocation7 + $0x38] sm:$0xff]
    %v388 = vld [vmem:[#allocation7 + $0x40] sm:$0xff]
    %v389 = vld [vmem:[#allocation7 + $0x48] sm:$0xff]
    %v390 = vld [vmem:[#allocation7 + $0x50] sm:$0xff]
    %v391 = vld [vmem:[#allocation7 + $0x58] sm:$0xff]
    %v392 = vld [vmem:[#allocation7 + $0x60] sm:$0xff]
    %v393 = vld [vmem:[#allocation7 + $0x68] sm:$0xff]
    %v394 = vld [vmem:[#allocation7 + $0x70] sm:$0xff]
    %v395 = vld [vmem:[#allocation7 + $0x78] sm:$0xff]
    %v396 = vld [vmem:[%s4] sm:$0x1]
    %v398 = vlaneseq
    %v399 = vshrl.u32 %v398, 7
    %v400 = vsub.s32 0, %v399
    %v401 = vrot.slane %v396, %v400
    %403 = vmatprep.subr.mxu0 0.0
    %404 = vmatpush1.msra.mxu0 %v380
    %405 = vmatprep.subr.mxu0 0.0
    %406 = vmatpush1.msra.mxu0 %v381
    %407 = vmatprep.subr.mxu0 0.0
    %408 = vmatpush1.msra.mxu0 %v382
    %409 = vmatprep.subr.mxu0 0.0
    %410 = vmatpush1.msra.mxu0 %v383
    %411 = vmatprep.subr.mxu0 0.0
    %412 = vmatpush1.msra.mxu0 %v384
    %413 = vmatprep.subr.mxu0 0.0
    %414 = vmatpush1.msra.mxu0 %v385
    %415 = vmatprep.subr.mxu0 0.0
    %416 = vmatpush1.msra.mxu0 %v386
    %417 = vmatprep.subr.mxu0 0.0
    %418 = vmatpush1.msra.mxu0 %v387
    %419 = vmatprep.subr.mxu0 0.0
    %420 = vmatpush1.msra.mxu0 %v388
    %421 = vmatprep.subr.mxu0 0.0
    %422 = vmatpush1.msra.mxu0 %v389
    %423 = vmatprep.subr.mxu0 0.0
    %424 = vmatpush1.msra.mxu0 %v390
    %425 = vmatprep.subr.mxu0 0.0
    %426 = vmatpush1.msra.mxu0 %v391
    %427 = vmatprep.subr.mxu0 0.0
    %428 = vmatpush1.msra.mxu0 %v392
    %429 = vmatprep.subr.mxu0 0.0
    %430 = vmatpush1.msra.mxu0 %v393
    %431 = vmatprep.subr.mxu0 0.0
    %432 = vmatpush1.msra.mxu0 %v394
    %433 = vmatprep.subr.mxu0 0.0
    %434 = vmatpush1.msra.mxu0 %v395
    %435 = vmatprep.subr.mxu0 0.0
    %436 = vmatpush1.msra.mxu0 0.0
    %437 = vmatprep.subr.mxu0 0.0
    %438 = vmatpush1.msra.mxu0 0.0
    %439 = vmatprep.subr.mxu0 0.0
    %440 = vmatpush1.msra.mxu0 0.0
    %441 = vmatprep.subr.mxu0 0.0
    %442 = vmatpush1.msra.mxu0 0.0
    %443 = vmatprep.subr.mxu0 0.0
    %444 = vmatpush1.msra.mxu0 0.0
    %445 = vmatprep.subr.mxu0 0.0
    %446 = vmatpush1.msra.mxu0 0.0
    %447 = vmatprep.subr.mxu0 0.0
    %448 = vmatpush1.msra.mxu0 0.0
    %449 = vmatprep.subr.mxu0 0.0
    %450 = vmatpush1.msra.mxu0 0.0
    %451 = vmatprep.subr.mxu0 0.0
    %452 = vmatpush1.msra.mxu0 0.0
    %453 = vmatprep.subr.mxu0 0.0
    %454 = vmatpush1.msra.mxu0 0.0
    %455 = vmatprep.subr.mxu0 0.0
    %456 = vmatpush1.msra.mxu0 0.0
    %457 = vmatprep.subr.mxu0 0.0
    %458 = vmatpush1.msra.mxu0 0.0
    %459 = vmatprep.subr.mxu0 0.0
    %460 = vmatpush1.msra.mxu0 0.0
    %461 = vmatprep.subr.mxu0 0.0
    %462 = vmatpush1.msra.mxu0 0.0
    %463 = vmatprep.subr.mxu0 0.0
    %464 = vmatpush1.msra.mxu0 0.0
    %465 = vmatprep.subr.mxu0 0.0
    %466 = vmatpush1.msra.mxu0 0.0
    %467 = vmatprep.mubr.f32.mxu0 0.0
    %468 = vmatmul.mubr.f32.gmra.mrb[0].mxu0 %v348
    %v469 = vpop.f32.mrb[0].mxu0
    %v470 = vadd.f32 %v401, %v469
    %v471 = vpop.f32.mrb[0].mxu0
    %472 = vmatprep.mubr.f32.mxu0 0.0
    %473 = vmatmul.mubr.f32.gmra.mrb[0].mxu0 %v349
    %v474 = vpop.f32.mrb[0].mxu0
    %v475 = vadd.f32 %v401, %v474
    %v476 = vpop.f32.mrb[0].mxu0
    %477 = vmatprep.mubr.f32.mxu0 0.0
    %478 = vmatmul.mubr.f32.gmra.mrb[0].mxu0 %v350
    %v479 = vpop.f32.mrb[0].mxu0
    %v480 = vadd.f32 %v401, %v479
    %v481 = vpop.f32.mrb[0].mxu0
    %482 = vmatprep.mubr.f32.mxu0 0.0
    %483 = vmatmul.mubr.f32.gmra.mrb[0].mxu0 %v351
    %v484 = vpop.f32.mrb[0].mxu0
    %v485 = vadd.f32 %v401, %v484
    %v486 = vpop.f32.mrb[0].mxu0
    %487 = vmatprep.mubr.f32.mxu0 0.0
    %488 = vmatmul.mubr.f32.gmra.mrb[0].mxu0 %v352
    %v489 = vpop.f32.mrb[0].mxu0
    %v490 = vadd.f32 %v401, %v489
    %v491 = vpop.f32.mrb[0].mxu0
    %492 = vmatprep.mubr.f32.mxu0 0.0
    %493 = vmatmul.mubr.f32.gmra.mrb[0].mxu0 %v353
    %v494 = vpop.f32.mrb[0].mxu0
    %v495 = vadd.f32 %v401, %v494
    %v496 = vpop.f32.mrb[0].mxu0
    %497 = vmatprep.mubr.f32.mxu0 0.0
    %498 = vmatmul.mubr.f32.gmra.mrb[0].mxu0 %v354
    %v499 = vpop.f32.mrb[0].mxu0
    %v500 = vadd.f32 %v401, %v499
    %v501 = vpop.f32.mrb[0].mxu0
    %502 = vmatprep.mubr.f32.mxu0 0.0
    %503 = vmatmul.mubr.f32.gmra.mrb[0].mxu0 %v355
    %v504 = vpop.f32.mrb[0].mxu0
    %v505 = vadd.f32 %v401, %v504
    %v506 = vpop.f32.mrb[0].mxu0
    %507 = vmatprep.mubr.f32.mxu0 0.0
    %508 = vmatmul.mubr.f32.gmra.mrb[0].mxu0 %v356
    %v509 = vpop.f32.mrb[0].mxu0
    %v510 = vadd.f32 %v401, %v509
    %v511 = vpop.f32.mrb[0].mxu0
    %512 = vmatprep.mubr.f32.mxu0 0.0
    %513 = vmatmul.mubr.f32.gmra.mrb[0].mxu0 %v357
    %v514 = vpop.f32.mrb[0].mxu0
    %v515 = vadd.f32 %v401, %v514
    %v516 = vpop.f32.mrb[0].mxu0
    %517 = vmatprep.mubr.f32.mxu0 0.0
    %518 = vmatmul.mubr.f32.gmra.mrb[0].mxu0 %v358
    %v519 = vpop.f32.mrb[0].mxu0
    %v520 = vadd.f32 %v401, %v519
    %v521 = vpop.f32.mrb[0].mxu0
    %522 = vmatprep.mubr.f32.mxu0 0.0
    %523 = vmatmul.mubr.f32.gmra.mrb[0].mxu0 %v359
    %v524 = vpop.f32.mrb[0].mxu0
    %v525 = vadd.f32 %v401, %v524
    %v526 = vpop.f32.mrb[0].mxu0
    %527 = vmatprep.mubr.f32.mxu0 0.0
    %528 = vmatmul.mubr.f32.gmra.mrb[0].mxu0 %v360
    %v529 = vpop.f32.mrb[0].mxu0
    %v530 = vadd.f32 %v401, %v529
    %v531 = vpop.f32.mrb[0].mxu0
    %532 = vmatprep.mubr.f32.mxu0 0.0
    %533 = vmatmul.mubr.f32.gmra.mrb[0].mxu0 %v361
    %v534 = vpop.f32.mrb[0].mxu0
    %v535 = vadd.f32 %v401, %v534
    %v536 = vpop.f32.mrb[0].mxu0
    %537 = vmatprep.mubr.f32.mxu0 0.0
    %538 = vmatmul.mubr.f32.gmra.mrb[0].mxu0 %v362
    %v539 = vpop.f32.mrb[0].mxu0
    %v540 = vadd.f32 %v401, %v539
    %v541 = vpop.f32.mrb[0].mxu0
    %542 = vmatprep.mubr.f32.mxu0 0.0
    %543 = vmatmul.mubr.f32.gmra.mrb[0].mxu0 %v363
    %v544 = vpop.f32.mrb[0].mxu0
    %v545 = vadd.f32 %v401, %v544
    %v546 = vpop.f32.mrb[0].mxu0
    %547 = vmatprep.mubr.f32.mxu0 0.0
    %548 = vmatmul.mubr.f32.gmra.mrb[0].mxu0 %v364
    %v549 = vpop.f32.mrb[0].mxu0
    %v550 = vadd.f32 %v401, %v549
    %v551 = vpop.f32.mrb[0].mxu0
    %552 = vmatprep.mubr.f32.mxu0 0.0
    %553 = vmatmul.mubr.f32.gmra.mrb[0].mxu0 %v365
    %v554 = vpop.f32.mrb[0].mxu0
    %v555 = vadd.f32 %v401, %v554
    %v556 = vpop.f32.mrb[0].mxu0
    %557 = vmatprep.mubr.f32.mxu0 0.0
    %558 = vmatmul.mubr.f32.gmra.mrb[0].mxu0 %v366
    %v559 = vpop.f32.mrb[0].mxu0
    %v560 = vadd.f32 %v401, %v559
    %v561 = vpop.f32.mrb[0].mxu0
    %562 = vmatprep.mubr.f32.mxu0 0.0
    %563 = vmatmul.mubr.f32.gmra.mrb[0].mxu0 %v367
    %v564 = vpop.f32.mrb[0].mxu0
    %v565 = vadd.f32 %v401, %v564
    %v566 = vpop.f32.mrb[0].mxu0
    %567 = vmatprep.mubr.f32.mxu0 0.0
    %568 = vmatmul.mubr.f32.gmra.mrb[0].mxu0 %v368
    %v569 = vpop.f32.mrb[0].mxu0
    %v570 = vadd.f32 %v401, %v569
    %v571 = vpop.f32.mrb[0].mxu0
    %572 = vmatprep.mubr.f32.mxu0 0.0
    %573 = vmatmul.mubr.f32.gmra.mrb[0].mxu0 %v369
    %v574 = vpop.f32.mrb[0].mxu0
    %v575 = vadd.f32 %v401, %v574
    %v576 = vpop.f32.mrb[0].mxu0
    %577 = vmatprep.mubr.f32.mxu0 0.0
    %578 = vmatmul.mubr.f32.gmra.mrb[0].mxu0 %v370
    %v579 = vpop.f32.mrb[0].mxu0
    %v580 = vadd.f32 %v401, %v579
    %v581 = vpop.f32.mrb[0].mxu0
    %582 = vmatprep.mubr.f32.mxu0 0.0
    %583 = vmatmul.mubr.f32.gmra.mrb[0].mxu0 %v371
    %v584 = vpop.f32.mrb[0].mxu0
    %v585 = vadd.f32 %v401, %v584
    %v586 = vpop.f32.mrb[0].mxu0
    %587 = vmatprep.mubr.f32.mxu0 0.0
    %588 = vmatmul.mubr.f32.gmra.mrb[0].mxu0 %v372
    %v589 = vpop.f32.mrb[0].mxu0
    %v590 = vadd.f32 %v401, %v589
    %v591 = vpop.f32.mrb[0].mxu0
    %592 = vmatprep.mubr.f32.mxu0 0.0
    %593 = vmatmul.mubr.f32.gmra.mrb[0].mxu0 %v373
    %v594 = vpop.f32.mrb[0].mxu0
    %v595 = vadd.f32 %v401, %v594
    %v596 = vpop.f32.mrb[0].mxu0
    %597 = vmatprep.mubr.f32.mxu0 0.0
    %598 = vmatmul.mubr.f32.gmra.mrb[0].mxu0 %v374
    %v599 = vpop.f32.mrb[0].mxu0
    %v600 = vadd.f32 %v401, %v599
    %v601 = vpop.f32.mrb[0].mxu0
    %602 = vmatprep.mubr.f32.mxu0 0.0
    %603 = vmatmul.mubr.f32.gmra.mrb[0].mxu0 %v375
    %v604 = vpop.f32.mrb[0].mxu0
    %v605 = vadd.f32 %v401, %v604
    %v606 = vpop.f32.mrb[0].mxu0
    %607 = vmatprep.mubr.f32.mxu0 0.0
    %608 = vmatmul.mubr.f32.gmra.mrb[0].mxu0 %v376
    %v609 = vpop.f32.mrb[0].mxu0
    %v610 = vadd.f32 %v401, %v609
    %v611 = vpop.f32.mrb[0].mxu0
    %612 = vmatprep.mubr.f32.mxu0 0.0
    %613 = vmatmul.mubr.f32.gmra.mrb[0].mxu0 %v377
    %v614 = vpop.f32.mrb[0].mxu0
    %v615 = vadd.f32 %v401, %v614
    %v616 = vpop.f32.mrb[0].mxu0
    %617 = vmatprep.mubr.f32.mxu0 0.0
    %618 = vmatmul.mubr.f32.gmra.mrb[0].mxu0 %v378
    %v619 = vpop.f32.mrb[0].mxu0
    %v620 = vadd.f32 %v401, %v619
    %v621 = vpop.f32.mrb[0].mxu0
    %622 = vmatprep.mubr.f32.mxu0 0.0
    %623 = vmatmul.mubr.f32.gmra.mrb[0].mxu0 %v379
    %v624 = vpop.f32.mrb[0].mxu0
    %v625 = vadd.f32 %v401, %v624
    %v626 = vpop.f32.mrb[0].mxu0
    %627 = vdwg.mxu0
    %v628 = vmax.f32 %v470, 0.0
    %v629 = vmax.f32 %v475, 0.0
    %v630 = vmax.f32 %v480, 0.0
    %v631 = vmax.f32 %v485, 0.0
    %v632 = vmax.f32 %v490, 0.0
    %v633 = vmax.f32 %v495, 0.0
    %v634 = vmax.f32 %v500, 0.0
    %v635 = vmax.f32 %v505, 0.0
    %v636 = vmax.f32 %v510, 0.0
    %v637 = vmax.f32 %v515, 0.0
    %v638 = vmax.f32 %v520, 0.0
    %v639 = vmax.f32 %v525, 0.0
    %v640 = vmax.f32 %v530, 0.0
    %v641 = vmax.f32 %v535, 0.0
    %v642 = vmax.f32 %v540, 0.0
    %v643 = vmax.f32 %v545, 0.0
    %v644 = vmax.f32 %v550, 0.0
    %v645 = vmax.f32 %v555, 0.0
    %v646 = vmax.f32 %v560, 0.0
    %v647 = vmax.f32 %v565, 0.0
    %v648 = vmax.f32 %v570, 0.0
    %v649 = vmax.f32 %v575, 0.0
    %v650 = vmax.f32 %v580, 0.0
    %v651 = vmax.f32 %v585, 0.0
    %v652 = vmax.f32 %v590, 0.0
    %v653 = vmax.f32 %v595, 0.0
    %v654 = vmax.f32 %v600, 0.0
    %v655 = vmax.f32 %v605, 0.0
    %v656 = vmax.f32 %v610, 0.0
    %v657 = vmax.f32 %v615, 0.0
    %v658 = vmax.f32 %v620, 0.0
    %v659 = vmax.f32 %v625, 0.0
    %660 = vst [vmem:[#allocation8] sm:$0xff] %v348
    %661 = vst [vmem:[#allocation8 + $0x8] sm:$0xff] %v628
    %662 = vst [vmem:[#allocation8 + $0x10] sm:$0xff] %v349
    %663 = vst [vmem:[#allocation8 + $0x18] sm:$0xff] %v629
    %664 = vst [vmem:[#allocation8 + $0x20] sm:$0xff] %v350
    %665 = vst [vmem:[#allocation8 + $0x28] sm:$0xff] %v630
    %666 = vst [vmem:[#allocation8 + $0x30] sm:$0xff] %v351
    %667 = vst [vmem:[#allocation8 + $0x38] sm:$0xff] %v631
    %668 = vst [vmem:[#allocation8 + $0x40] sm:$0xff] %v352
    %669 = vst [vmem:[#allocation8 + $0x48] sm:$0xff] %v632
    %670 = vst [vmem:[#allocation8 + $0x50] sm:$0xff] %v353
    %671 = vst [vmem:[#allocation8 + $0x58] sm:$0xff] %v633
    %672 = vst [vmem:[#allocation8 + $0x60] sm:$0xff] %v354
    %673 = vst [vmem:[#allocation8 + $0x68] sm:$0xff] %v634
    %674 = vst [vmem:[#allocation8 + $0x70] sm:$0xff] %v355
    %675 = vst [vmem:[#allocation8 + $0x78] sm:$0xff] %v635
    %676 = vst [vmem:[#allocation8 + $0x80] sm:$0xff] %v356
    %677 = vst [vmem:[#allocation8 + $0x88] sm:$0xff] %v636
    %678 = vst [vmem:[#allocation8 + $0x90] sm:$0xff] %v357
    %679 = vst [vmem:[#allocation8 + $0x98] sm:$0xff] %v637
    %680 = vst [vmem:[#allocation8 + $0xa0] sm:$0xff] %v358
    %681 = vst [vmem:[#allocation8 + $0xa8] sm:$0xff] %v638
    %682 = vst [vmem:[#allocation8 + $0xb0] sm:$0xff] %v359
    %683 = vst [vmem:[#allocation8 + $0xb8] sm:$0xff] %v639
    %684 = vst [vmem:[#allocation8 + $0xc0] sm:$0xff] %v360
    %685 = vst [vmem:[#allocation8 + $0xc8] sm:$0xff] %v640
    %686 = vst [vmem:[#allocation8 + $0xd0] sm:$0xff] %v361
    %687 = vst [vmem:[#allocation8 + $0xd8] sm:$0xff] %v641
    %688 = vst [vmem:[#allocation8 + $0xe0] sm:$0xff] %v362
    %689 = vst [vmem:[#allocation8 + $0xe8] sm:$0xff] %v642
    %690 = vst [vmem:[#allocation8 + $0xf0] sm:$0xff] %v363
    %691 = vst [vmem:[#allocation8 + $0xf8] sm:$0xff] %v643
    %692 = vst [vmem:[#allocation8 + $0x100] sm:$0xff] %v364
    %693 = vst [vmem:[#allocation8 + $0x108] sm:$0xff] %v644
    %694 = vst [vmem:[#allocation8 + $0x110] sm:$0xff] %v365
    %695 = vst [vmem:[#allocation8 + $0x118] sm:$0xff] %v645
    %696 = vst [vmem:[#allocation8 + $0x120] sm:$0xff] %v366
    %697 = vst [vmem:[#allocation8 + $0x128] sm:$0xff] %v646
    %698 = vst [vmem:[#allocation8 + $0x130] sm:$0xff] %v367
    %699 = vst [vmem:[#allocation8 + $0x138] sm:$0xff] %v647
    %700 = vst [vmem:[#allocation8 + $0x140] sm:$0xff] %v368
    %701 = vst [vmem:[#allocation8 + $0x148] sm:$0xff] %v648
    %702 = vst [vmem:[#allocation8 + $0x150] sm:$0xff] %v369
    %703 = vst [vmem:[#allocation8 + $0x158] sm:$0xff] %v649
    %704 = vst [vmem:[#allocation8 + $0x160] sm:$0xff] %v370
    %705 = vst [vmem:[#allocation8 + $0x168] sm:$0xff] %v650
    %706 = vst [vmem:[#allocation8 + $0x170] sm:$0xff] %v371
    %707 = vst [vmem:[#allocation8 + $0x178] sm:$0xff] %v651
    %708 = vst [vmem:[#allocation8 + $0x180] sm:$0xff] %v372
    %709 = vst [vmem:[#allocation8 + $0x188] sm:$0xff] %v652
    %710 = vst [vmem:[#allocation8 + $0x190] sm:$0xff] %v373
    %711 = vst [vmem:[#allocation8 + $0x198] sm:$0xff] %v653
    %712 = vst [vmem:[#allocation8 + $0x1a0] sm:$0xff] %v374
    %713 = vst [vmem:[#allocation8 + $0x1a8] sm:$0xff] %v654
    %714 = vst [vmem:[#allocation8 + $0x1b0] sm:$0xff] %v375
    %715 = vst [vmem:[#allocation8 + $0x1b8] sm:$0xff] %v655
    %716 = vst [vmem:[#allocation8 + $0x1c0] sm:$0xff] %v376
    %717 = vst [vmem:[#allocation8 + $0x1c8] sm:$0xff] %v656
    %718 = vst [vmem:[#allocation8 + $0x1d0] sm:$0xff] %v377
    %719 = vst [vmem:[#allocation8 + $0x1d8] sm:$0xff] %v657
    %720 = vst [vmem:[#allocation8 + $0x1e0] sm:$0xff] %v378
    %721 = vst [vmem:[#allocation8 + $0x1e8] sm:$0xff] %v658
    %722 = vst [vmem:[#allocation8 + $0x1f0] sm:$0xff] %v379
    %723 = vst [vmem:[#allocation8 + $0x1f8] sm:$0xff] %v659
    %v724 = vld [vmem:[%s5] sm:$0xff]
    %v725 = vld [vmem:[%s5 + $0x8] sm:$0xff]
    %726 = vmatprep.subr.mxu0 %v628
    %727 = vmatpush1.msra.mxu0 %v348
    %728 = vmatprep.subr.mxu0 %v629
    %729 = vmatpush1.msra.mxu0 %v349
    %730 = vmatprep.subr.mxu0 %v630
    %731 = vmatpush1.msra.mxu0 %v350
    %732 = vmatprep.subr.mxu0 %v631
    %733 = vmatpush1.msra.mxu0 %v351
    %734 = vmatprep.subr.mxu0 %v632
    %735 = vmatpush1.msra.mxu0 %v352
    %736 = vmatprep.subr.mxu0 %v633
    %737 = vmatpush1.msra.mxu0 %v353
    %738 = vmatprep.subr.mxu0 %v634
    %739 = vmatpush1.msra.mxu0 %v354
    %740 = vmatprep.subr.mxu0 %v635
    %741 = vmatpush1.msra.mxu0 %v355
    %742 = vmatprep.subr.mxu0 %v636
    %743 = vmatpush1.msra.mxu0 %v356
    %744 = vmatprep.subr.mxu0 %v637
    %745 = vmatpush1.msra.mxu0 %v357
    %746 = vmatprep.subr.mxu0 %v638
    %747 = vmatpush1.msra.mxu0 %v358
    %748 = vmatprep.subr.mxu0 %v639
    %749 = vmatpush1.msra.mxu0 %v359
    %750 = vmatprep.subr.mxu0 %v640
    %751 = vmatpush1.msra.mxu0 %v360
    %752 = vmatprep.subr.mxu0 %v641
    %753 = vmatpush1.msra.mxu0 %v361
    %754 = vmatprep.subr.mxu0 %v642
    %755 = vmatpush1.msra.mxu0 %v362
    %756 = vmatprep.subr.mxu0 %v643
    %757 = vmatpush1.msra.mxu0 %v363
    %758 = vmatprep.subr.mxu0 %v644
    %759 = vmatpush1.msra.mxu0 %v364
    %760 = vmatprep.subr.mxu0 %v645
    %761 = vmatpush1.msra.mxu0 %v365
    %762 = vmatprep.subr.mxu0 %v646
    %763 = vmatpush1.msra.mxu0 %v366
    %764 = vmatprep.subr.mxu0 %v647
    %765 = vmatpush1.msra.mxu0 %v367
    %766 = vmatprep.subr.mxu0 %v648
    %767 = vmatpush1.msra.mxu0 %v368
    %768 = vmatprep.subr.mxu0 %v649
    %769 = vmatpush1.msra.mxu0 %v369
    %770 = vmatprep.subr.mxu0 %v650
    %771 = vmatpush1.msra.mxu0 %v370
    %772 = vmatprep.subr.mxu0 %v651
    %773 = vmatpush1.msra.mxu0 %v371
    %774 = vmatprep.subr.mxu0 %v652
    %775 = vmatpush1.msra.mxu0 %v372
    %776 = vmatprep.subr.mxu0 %v653
    %777 = vmatpush1.msra.mxu0 %v373
    %778 = vmatprep.subr.mxu0 %v654
    %779 = vmatpush1.msra.mxu0 %v374
    %780 = vmatprep.subr.mxu0 %v655
    %781 = vmatpush1.msra.mxu0 %v375
    %782 = vmatprep.subr.mxu0 %v656
    %783 = vmatpush1.msra.mxu0 %v376
    %784 = vmatprep.subr.mxu0 %v657
    %785 = vmatpush1.msra.mxu0 %v377
    %786 = vmatprep.subr.mxu0 %v658
    %787 = vmatpush1.msra.mxu0 %v378
    %788 = vmatprep.subr.mxu0 %v659
    %789 = vmatpush1.msra.mxu0 %v379
    %790 = vmatprep.mubr.f32.mxu0 %v725
    %791 = vmatmul.mubr.f32.gmra.mrb[0].mxu0 %v724
    %v792 = vpop.f32.mrb[0].mxu0
    %v793 = vadd.f32 0.0, %v792
    %v794 = vpop.f32.mrb[0].mxu0
    %v795 = vadd.f32 0.0, %v794
    %796 = vdwg.mxu0
    %797 = vst [vmem:[#allocation9] sm:$0xff] %v793
    %798 = vst [vmem:[#allocation9 + $0x8] sm:$0xff] %v795
    // Predicated region
    $region38: #{tpu_custom_call.1} parent=1 // pred_check
      _
    $region39: #{tpu_custom_call.1} parent=1 // pred_check_branch
      %800 = sbr.rel (0) target = $region41
    $region40: #{tpu_custom_call.1} parent=1 // pred_region
      %s802 = ssub.s32 8192, 8192
      %803 = vsyncadd [#allocation4], %s802
      %s804 = sshll.u32 [#allocation8], 4
      %s805 = int_to_ptr.vmem [resolvable:$true] %s804
      %810 = dma.vmem_to_hbm [thread:$0]  %s805, 8192, %s6, [#allocation4], 256, 256, 16
    $region41: #{tpu_custom_call.1} parent=1 // pred_fallthru
      _
    // Predicated region
    $region42: #{tpu_custom_call.1} parent=1 // pred_check
      _
    $region43: #{tpu_custom_call.1} parent=1 // pred_check_branch
      %812 = sbr.rel (0) target = $region45
    $region44: #{tpu_custom_call.1} parent=1 // pred_region
      %s814 = ssub.s32 256, 256
      %815 = vsyncadd [#allocation10], %s814
      %s817 = sshll.u32 [#allocation9], 4
      %s818 = int_to_ptr.vmem [resolvable:$true] %s817
      %820 = dma.vmem_to_hbm [thread:$0]  %s818, 256, %s7, [#allocation10]
    $region45: #{tpu_custom_call.1} parent=1 // pred_fallthru
      _
    // Predicated region
    $region46: #{tpu_custom_call.1} parent=1 // pred_check
      _
    $region47: #{tpu_custom_call.1} parent=1 // pred_check_branch
      %822 = sbr.rel (0) target = $region49
    $region48: #{tpu_custom_call.1} parent=1 // pred_region
      %823 = dma.done [#allocation4], 8192
    $region49: #{tpu_custom_call.1} parent=1 // pred_fallthru
      _
    // Predicated region
    $region50: #{tpu_custom_call.1} parent=1 // pred_check
      _
    $region51: #{tpu_custom_call.1} parent=1 // pred_check_branch
      %825 = sbr.rel (0) target = $region53
    $region52: #{tpu_custom_call.1} parent=1 // pred_region
      %826 = dma.done [#allocation10], 256
    $region53: #{tpu_custom_call.1} parent=1 // pred_fallthru
      _
    %827 = vsyncpa [#allocation3], 1
    %828 = vsyncpa [#allocation6], 1
    %829 = vsyncpa [#allocation4], 1
    %830 = vsyncpa [#allocation10], 1

</llo_original>
